<compile_context>
chip_gen: v5e
topology: v5e:2x2
jax: 0.10.0
libtpu: 0.0.40
codegen_flags: <defaults>
</compile_context>

<pallas_src>
import functools
import math

import jax
import jax.numpy as jnp
from jax.experimental import pallas as pl
from jax.experimental.pallas import tpu as pltpu

_LANE = 128
_SUBLANE = 8


def _round_up(n, m):
    return ((n + m - 1) // m) * m


# ---------------------------------------------------------------------------
# Kernels
# ---------------------------------------------------------------------------

def _mlp_kernel(x_ref, w1_ref, b1_ref, w2_ref, b2_ref, o_ref, *, n_out):
    # x_ref:  (TILE_M, D)     f32 token tile (bf16 cast happens here, on-chip)
    # w1_ref: (D, Hp)         bf16 resident first-Linear weight (pre-transposed)
    # b1_ref: (1, Hp)         f32
    # w2_ref: (Hp, Cp)        bf16 resident second-Linear weight (pre-transposed)
    # b2_ref: (1, Cp)         f32
    # o_ref:  (TILE_M, n_out) f32 logits (narrow block; masked store)
    x = x_ref[...].astype(w1_ref.dtype)                     # in-kernel bf16 cast
    h = jnp.dot(x, w1_ref[...], preferred_element_type=jnp.float32)
    h = jnp.maximum(h + b1_ref[...], 0.0).astype(w2_ref.dtype)   # bias+ReLU in f32
    o = jnp.dot(h, w2_ref[...], preferred_element_type=jnp.float32) + b2_ref[...]
    o_ref[...] = o[:, :n_out].astype(o_ref.dtype)


def _mlp_kernel_ktiled(x_ref, w1_ref, b1_ref, w2_ref, b2_ref, o_ref, acc_ref,
                       *, n_out):
    # K-tiled fallback: grid = (M_tiles, K_tiles), reduction axis (k) last.
    # acc_ref: (TILE_M, Hp) f32 VMEM accumulator for x @ W1.
    k = pl.program_id(1)

    @pl.when(k == 0)
    def _():
        acc_ref[...] = jnp.zeros_like(acc_ref)

    x = x_ref[...].astype(w1_ref.dtype)
    acc_ref[...] += jnp.dot(x, w1_ref[...], preferred_element_type=jnp.float32)

    @pl.when(k == pl.num_programs(1) - 1)
    def _():
        h = jnp.maximum(acc_ref[...] + b1_ref[...], 0.0).astype(w2_ref.dtype)
        o = jnp.dot(h, w2_ref[...], preferred_element_type=jnp.float32) + b2_ref[...]
        o_ref[...] = o[:, :n_out].astype(o_ref.dtype)


# ---------------------------------------------------------------------------
# Parameter prep (one-time; do NOT redo per forward call)
# ---------------------------------------------------------------------------

def prepare_classifier_params(w1, b1, w2, b2, compute_dtype=jnp.bfloat16):
    """Transpose PyTorch (out,in) weights to (in,out), zero-pad hidden/output
    widths to 128 lanes, cast weights to the MXU compute dtype. Biases stay f32."""
    H, D = w1.shape
    C = w2.shape[0]
    Hp = _round_up(max(H, _LANE), _LANE)
    Cp = _round_up(max(C, _LANE), _LANE)
    w1_t = jnp.zeros((D, Hp), compute_dtype).at[:, :H].set(w1.T.astype(compute_dtype))
    b1_p = jnp.zeros((1, Hp), jnp.float32).at[:, :H].set(b1.astype(jnp.float32))
    w2_t = jnp.zeros((Hp, Cp), compute_dtype).at[:H, :C].set(w2.T.astype(compute_dtype))
    b2_p = jnp.zeros((1, Cp), jnp.float32).at[:, :C].set(b2.astype(jnp.float32))
    return {"w1_t": w1_t, "b1": b1_p, "w2_t": w2_t, "b2": b2_p, "n_out": int(C)}


# ---------------------------------------------------------------------------
# Chip-aware tiling helpers
# ---------------------------------------------------------------------------

def _vmem_capacity_bytes():
    """Per-core VMEM capacity (128 MiB on v5e/v6e, 64 MiB/TC on v7x)."""
    try:
        return int(pltpu.get_tpu_info().vmem_capacity_bytes)
    except Exception:
        return 64 << 20  # conservative default (v7x per-TensorCore VMEM)


def _pick_tile_m(M, per_row_bytes, avail_bytes):
    """Largest row tile whose per-tile VMEM footprint fits the available budget."""
    m8 = _round_up(max(M, _SUBLANE), _SUBLANE)
    for tm in (4096, 2048, 1024, 512, 256, 128, 64, 32, 16, 8):
        if tm > m8:
            continue
        if tm * per_row_bytes <= avail_bytes:
            return tm
    return _SUBLANE


# ---------------------------------------------------------------------------
# Forward pass
# ---------------------------------------------------------------------------

def classifier_forward(x, params, *, force_k_tiling=False):
    """Forward of Classifier.mlp.

    Args:
      x:      (batch, seq, input_dim) float32
      params: dict from prepare_classifier_params()
    Returns:
      (batch, seq, n_out) float32 logits (forward() applies no sigmoid/softmax).
    """
    w1_t, b1 = params["w1_t"], params["b1"]
    w2_t, b2 = params["w2_t"], params["b2"]
    C = params["n_out"]

    B, S, D = x.shape
    Hp = w1_t.shape[1]
    Cp = w2_t.shape[1]
    M = B * S
    wbytes = jnp.dtype(w1_t.dtype).itemsize

    # Free reshape only — no dtype cast and no padding pass over x in HBM.
    x2d = x.reshape(M, D)
    out_shape = jax.ShapeDtypeStruct((M, C), jnp.float32)

    cap = _vmem_capacity_bytes()
    vmem_cap = min(cap, 100 << 20)          # ~100 MiB on v5e/v6e, 64 MiB on v7x
    budget = int(0.45 * cap)                # ~57 MiB on 128-MiB chips, ~28 MiB on v7x

    # Resident bytes (conservatively assume double-buffered constant blocks;
    # Buffered(1) only shrinks this further when accepted).
    bias_bytes = 2 * (Hp + Cp) * 4
    w2_bytes = 2 * Hp * Cp * wbytes
    w1_full_bytes = 2 * D * Hp * wbytes

    cost = pl.CostEstimate(
        flops=2 * M * (D * Hp + Hp * Cp),
        transcendentals=0,
        bytes_accessed=M * D * 4 + M * C * 4
        + (D * Hp + Hp * Cp) * wbytes + (Hp + Cp) * 4,
    )

    # Decide whether W1 must be K-tiled (streamed along input_dim).
    tile_k = next((t for t in (512, 256, 128) if t < D and D % t == 0), None)
    use_k = (force_k_tiling
             or (w1_full_bytes + w2_bytes + bias_bytes > budget // 2)) and tile_k is not None

    if not use_k:
        # --- default path: W1 fully resident, stream row tiles of x ---------
        resident_bytes = w1_full_bytes + w2_bytes + bias_bytes
        per_row = (2 * D * 4            # double-buffered f32 x tile
                   + D * wbytes         # in-kernel bf16 copy of x
                   + Hp * (4 + wbytes)  # hidden f32 + bf16
                   + Cp * 4             # padded f32 logits before slice
                   + 2 * C * 4)         # double-buffered narrow f32 out tile
        tile_m = _pick_tile_m(M, per_row, max(budget - resident_bytes, 1 << 20))
        vmem_limit = int(min(max(resident_bytes + tile_m * per_row + (2 << 20),
                                 32 << 20), vmem_cap))

        def run(single_buffer):
            # Single-buffer the constant-index resident operands (no re-DMA,
            # so one copy suffices); fall back to default 2-buffer if rejected.
            rkw = {"pipeline_mode": pl.Buffered(1)} if single_buffer else {}
            in_specs = [
                pl.BlockSpec((tile_m, D), lambda i: (i, 0)),        # streamed x
                pl.BlockSpec((D, Hp), lambda i: (0, 0), **rkw),     # resident W1
                pl.BlockSpec((1, Hp), lambda i: (0, 0), **rkw),     # resident b1
                pl.BlockSpec((Hp, Cp), lambda i: (0, 0), **rkw),    # resident W2
                pl.BlockSpec((1, Cp), lambda i: (0, 0), **rkw),     # resident b2
            ]
            return pl.pallas_call(
                functools.partial(_mlp_kernel, n_out=C),
                out_shape=out_shape,
                grid=(pl.cdiv(M, tile_m),),
                in_specs=in_specs,
                out_specs=pl.BlockSpec((tile_m, C), lambda i: (i, 0)),
                compiler_params=pltpu.CompilerParams(
                    dimension_semantics=("parallel",),
                    vmem_limit_bytes=vmem_limit,
                ),
                cost_estimate=cost,
            )(x2d, w1_t, b1, w2_t, b2)

    else:
        # --- K-tiled fallback: stream W1 along input_dim, f32 accumulator ---
        resident_bytes = w2_bytes + bias_bytes + 2 * tile_k * Hp * wbytes
        per_row = (2 * tile_k * 4        # double-buffered f32 x tile
                   + tile_k * wbytes     # in-kernel bf16 copy
                   + Hp * 4              # f32 accumulator scratch
                   + Hp * (4 + wbytes)   # hidden f32 + bf16 (finalize)
                   + Cp * 4              # padded f32 logits before slice
                   + 2 * C * 4)          # double-buffered narrow f32 out tile
        tile_m = _pick_tile_m(M, per_row, max(budget - resident_bytes, 1 << 20))
        vmem_limit = int(min(max(resident_bytes + tile_m * per_row + (2 << 20),
                                 32 << 20), vmem_cap))

        def run(single_buffer):
            rkw = {"pipeline_mode": pl.Buffered(1)} if single_buffer else {}
            in_specs = [
                pl.BlockSpec((tile_m, tile_k), lambda i, k: (i, k)),   # x tiles
                pl.BlockSpec((tile_k, Hp), lambda i, k: (k, 0)),       # W1 K-tiles
                pl.BlockSpec((1, Hp), lambda i, k: (0, 0), **rkw),     # resident b1
                pl.BlockSpec((Hp, Cp), lambda i, k: (0, 0), **rkw),    # resident W2
                pl.BlockSpec((1, Cp), lambda i, k: (0, 0), **rkw),     # resident b2
            ]
            return pl.pallas_call(
                functools.partial(_mlp_kernel_ktiled, n_out=C),
                out_shape=out_shape,
                grid=(pl.cdiv(M, tile_m), D // tile_k),
                in_specs=in_specs,
                out_specs=pl.BlockSpec((tile_m, C), lambda i, k: (i, 0)),
                scratch_shapes=[pltpu.VMEM((tile_m, Hp), jnp.float32)],
                compiler_params=pltpu.CompilerParams(
                    dimension_semantics=("parallel", "arbitrary"),
                    vmem_limit_bytes=vmem_limit,
                ),
                cost_estimate=cost,
            )(x2d, w1_t, b1, w2_t, b2)

    try:
        out2d = run(single_buffer=True)
    except Exception:
        # pl.Buffered(1) not supported by this Pallas build -> default buffering.
        out2d = run(single_buffer=False)

    return out2d.reshape(B, S, C)


# ---------------------------------------------------------------------------
# Init + self-checks
# ---------------------------------------------------------------------------

def init_classifier_params(key, input_dim, n_class):
    """Deterministic init mimicking nn.Linear default (uniform +-1/sqrt(fan_in))."""
    hidden = input_dim // 2
    out_dim = 1 if n_class == 2 else n_class
    k1, k2, k3, k4 = jax.random.split(key, 4)
    bound1 = 1.0 / math.sqrt(input_dim)
    bound2 = 1.0 / math.sqrt(hidden)
    w1 = jax.random.uniform(k1, (hidden, input_dim), jnp.float32, -bound1, bound1)
    b1 = jax.random.uniform(k2, (hidden,), jnp.float32, -bound1, bound1)
    w2 = jax.random.uniform(k3, (out_dim, hidden), jnp.float32, -bound2, bound2)
    b2 = jax.random.uniform(k4, (out_dim,), jnp.float32, -bound2, bound2)
    return w1, b1, w2, b2


def _check(x, w1, b1, w2, b2, out):
    # Reference 1: emulate the kernel's bf16-input / f32-accumulate path.
    xb = x.astype(jnp.bfloat16).astype(jnp.float32)
    w1b = w1.astype(jnp.bfloat16).astype(jnp.float32)
    w2b = w2.astype(jnp.bfloat16).astype(jnp.float32)
    h = jnp.maximum(jnp.einsum("bsd,hd->bsh", xb, w1b) + b1, 0.0)
    hb = h.astype(jnp.bfloat16).astype(jnp.float32)
    ref_bf16 = jnp.einsum("bsh,ch->bsc", hb, w2b) + b2
    assert jnp.allclose(out, ref_bf16, atol=1e-2, rtol=1e-2), "mismatch vs bf16-emulated reference"
    # Reference 2: full f32 math (loose tolerance; bf16 MXU inputs).
    ref_f32 = jnp.maximum(jnp.einsum("bsd,hd->bsh", x, w1) + b1, 0.0) @ w2.T + b2
    assert jnp.allclose(out, ref_f32, atol=1e-1, rtol=1e-1), "mismatch vs f32 reference"


if __name__ == "__main__":
    key = jax.random.PRNGKey(0)

    # Case 1: small shapes consistent with the module (multi-class head).
    batch, seq_len, input_dim, n_class = 2, 8, 32, 5
    kx, kp, key = jax.random.split(key, 3)
    x = jax.random.normal(kx, (batch, seq_len, input_dim), dtype=jnp.float32)
    w1, b1, w2, b2 = init_classifier_params(kp, input_dim, n_class)
    params = prepare_classifier_params(w1, b1, w2, b2)     # one-time prep (hoisted)
    out = jax.block_until_ready(classifier_forward(x, params))
    assert out.shape == (batch, seq_len, n_class), out.shape
    _check(x, w1, b1, w2, b2, out)

    # Case 2: ragged token count (B*S not a multiple of the row tile) ->
    # exercises the no-pad / masked-last-block path.
    batch, seq_len = 3, 7
    kx, kp, key = jax.random.split(key, 3)
    x = jax.random.normal(kx, (batch, seq_len, input_dim), dtype=jnp.float32)
    w1, b1, w2, b2 = init_classifier_params(kp, input_dim, n_class)
    params = prepare_classifier_params(w1, b1, w2, b2)
    out = jax.block_until_ready(classifier_forward(x, params))
    assert out.shape == (batch, seq_len, n_class), out.shape
    _check(x, w1, b1, w2, b2, out)

    # Case 3: forced K-tiled path (input_dim streamed through a VMEM f32
    # accumulator) with the binary head (n_class == 2 -> single logit).
    batch, seq_len, input_dim, n_class = 2, 8, 256, 2
    kx, kp, key = jax.random.split(key, 3)
    x = jax.random.normal(kx, (batch, seq_len, input_dim), dtype=jnp.float32)
    w1, b1, w2, b2 = init_classifier_params(kp, input_dim, n_class)
    params = prepare_classifier_params(w1, b1, w2, b2)
    out = jax.block_until_ready(classifier_forward(x, params, force_k_tiling=True))
    assert out.shape == (batch, seq_len, 1), out.shape
    _check(x, w1, b1, w2, b2, out)

    # TODO(synk): loss() (BCEWithLogitsLoss / CrossEntropyLoss) and the `last`
    # activation (sigmoid / softmax) are not part of forward() and stay in JAX.
    print("KERNEL_OK")
</pallas_src>

<mosaic_0001>
module attributes {stable_mosaic.version = 11 : i64} {
  func.func @_mlp_kernel(%arg0: i32, %arg1: memref<16x32xf32, #tpu.memory_space<vmem>>, %arg2: memref<32x128xbf16, #tpu.memory_space<vmem>>, %arg3: memref<1x128xf32, #tpu.memory_space<vmem>>, %arg4: memref<128x128xbf16, #tpu.memory_space<vmem>>, %arg5: memref<1x128xf32, #tpu.memory_space<vmem>>, %arg6: memref<16x5xf32, #tpu.memory_space<vmem>>) attributes {dimension_semantics = [#tpu.dimension_semantics<parallel>], iteration_bounds = array<i64: 1>, scalar_prefetch = 0 : i64, scratch_operands = 0 : i64, tpu.core_type = #tpu.core_type<tc>, window_params = [{transform_indices = @transform_0, window_bounds = array<i64: 16, 32>}, {pipeline_mode = #tpu.pipeline_mode<synchronous>, transform_indices = @transform_1, window_bounds = array<i64: 32, 128>}, {pipeline_mode = #tpu.pipeline_mode<synchronous>, transform_indices = @transform_2, window_bounds = array<i64: 1, 128>}, {pipeline_mode = #tpu.pipeline_mode<synchronous>, transform_indices = @transform_3, window_bounds = array<i64: 128, 128>}, {pipeline_mode = #tpu.pipeline_mode<synchronous>, transform_indices = @transform_4, window_bounds = array<i64: 1, 128>}, {transform_indices = @transform_5, window_bounds = array<i64: 16, 5>}]} {
    %c0 = arith.constant 0 : index
    %c0_0 = arith.constant 0 : index
    %0 = vector.load %arg1[%c0, %c0_0] : memref<16x32xf32, #tpu.memory_space<vmem>>, vector<16x32xf32>
    %1 = arith.truncf %0 : vector<16x32xf32> to vector<16x32xbf16>
    %c0_1 = arith.constant 0 : index
    %c0_2 = arith.constant 0 : index
    %2 = vector.load %arg2[%c0_1, %c0_2] : memref<32x128xbf16, #tpu.memory_space<vmem>>, vector<32x128xbf16>
    %cst = arith.constant dense<0.000000e+00> : vector<16x128xf32>
    %3 = tpu.matmul %1, %2, %cst {dimension_numbers = #tpu.dot_dimension_numbers<[1], [0], [0], [1], [0, 0, 1, 1], [], []>} : vector<16x32xbf16>, vector<32x128xbf16>, vector<16x128xf32> -> vector<16x128xf32>
    %c0_3 = arith.constant 0 : index
    %c0_4 = arith.constant 0 : index
    %4 = vector.load %arg3[%c0_3, %c0_4] : memref<1x128xf32, #tpu.memory_space<vmem>>, vector<1x128xf32>
    %5 = vector.broadcast %4 : vector<1x128xf32> to vector<16x128xf32>
    %6 = arith.addf %3, %5 : vector<16x128xf32>
    %cst_5 = arith.constant 0.000000e+00 : f32
    %7 = vector.broadcast %cst_5 : f32 to vector<16x128xf32>
    %8 = arith.maximumf %6, %7 : vector<16x128xf32>
    %9 = arith.truncf %8 : vector<16x128xf32> to vector<16x128xbf16>
    %c0_6 = arith.constant 0 : index
    %c0_7 = arith.constant 0 : index
    %10 = vector.load %arg4[%c0_6, %c0_7] : memref<128x128xbf16, #tpu.memory_space<vmem>>, vector<128x128xbf16>
    %cst_8 = arith.constant dense<0.000000e+00> : vector<16x128xf32>
    %11 = tpu.matmul %9, %10, %cst_8 {dimension_numbers = #tpu.dot_dimension_numbers<[1], [0], [0], [1], [0, 0, 1, 1], [], []>} : vector<16x128xbf16>, vector<128x128xbf16>, vector<16x128xf32> -> vector<16x128xf32>
    %c0_9 = arith.constant 0 : index
    %c0_10 = arith.constant 0 : index
    %12 = vector.load %arg5[%c0_9, %c0_10] : memref<1x128xf32, #tpu.memory_space<vmem>>, vector<1x128xf32>
    %13 = vector.broadcast %12 : vector<1x128xf32> to vector<16x128xf32>
    %14 = arith.addf %11, %13 : vector<16x128xf32>
    %15 = vector.extract_strided_slice %14 {offsets = [0, 0], sizes = [16, 5], strides = [1, 1]} : vector<16x128xf32> to vector<16x5xf32>
    %c0_11 = arith.constant 0 : index
    %c0_12 = arith.constant 0 : index
    %16 = vector.load %arg6[%c0_11, %c0_12] : memref<16x5xf32, #tpu.memory_space<vmem>>, vector<16x5xf32>
    tpu.vector_store %arg6[%c0_11, %c0_12], %15 {strides = array<i32>} : memref<16x5xf32, #tpu.memory_space<vmem>>, vector<16x5xf32>,
    return
  }
  func.func @transform_0(%arg0: i32) -> (i32, i32) {
    %c0_i32 = arith.constant 0 : i32
    %c0_i32_0 = arith.constant 0 : i32
    return %arg0, %c0_i32 : i32, i32
  }
  func.func @transform_1(%arg0: i32) -> (i32, i32) {
    %c0_i32 = arith.constant 0 : i32
    %c0_i32_0 = arith.constant 0 : i32
    %c0_i32_1 = arith.constant 0 : i32
    return %c0_i32, %c0_i32_0 : i32, i32
  }
  func.func @transform_2(%arg0: i32) -> (i32, i32) {
    %c0_i32 = arith.constant 0 : i32
    %c0_i32_0 = arith.constant 0 : i32
    %c0_i32_1 = arith.constant 0 : i32
    return %c0_i32, %c0_i32_0 : i32, i32
  }
  func.func @transform_3(%arg0: i32) -> (i32, i32) {
    %c0_i32 = arith.constant 0 : i32
    %c0_i32_0 = arith.constant 0 : i32
    %c0_i32_1 = arith.constant 0 : i32
    return %c0_i32, %c0_i32_0 : i32, i32
  }
  func.func @transform_4(%arg0: i32) -> (i32, i32) {
    %c0_i32 = arith.constant 0 : i32
    %c0_i32_0 = arith.constant 0 : i32
    %c0_i32_1 = arith.constant 0 : i32
    return %c0_i32, %c0_i32_0 : i32, i32
  }
  func.func @transform_5(%arg0: i32) -> (i32, i32) {
    %c0_i32 = arith.constant 0 : i32
    %c0_i32_0 = arith.constant 0 : i32
    return %arg0, %c0_i32 : i32, i32
  }
}

module attributes {stable_mosaic.version = 11 : i64} {
  func.func @_mlp_kernel(%arg0: i32, %arg1: memref<16x32xf32, #tpu.memory_space<vmem>>, %arg2: memref<32x128xbf16, #tpu.memory_space<vmem>>, %arg3: memref<1x128xf32, #tpu.memory_space<vmem>>, %arg4: memref<128x128xbf16, #tpu.memory_space<vmem>>, %arg5: memref<1x128xf32, #tpu.memory_space<vmem>>, %arg6: memref<16x5xf32, #tpu.memory_space<vmem>>) attributes {dimension_semantics = [#tpu.dimension_semantics<parallel>], iteration_bounds = array<i64: 1>, scalar_prefetch = 0 : i64, scratch_operands = 0 : i64, tpu.core_type = #tpu.core_type<tc>, window_params = [{transform_indices = @transform_0, window_bounds = array<i64: 16, 32>}, {pipeline_mode = #tpu.pipeline_mode<synchronous>, transform_indices = @transform_1, window_bounds = array<i64: 32, 128>}, {pipeline_mode = #tpu.pipeline_mode<synchronous>, transform_indices = @transform_2, window_bounds = array<i64: 1, 128>}, {pipeline_mode = #tpu.pipeline_mode<synchronous>, transform_indices = @transform_3, window_bounds = array<i64: 128, 128>}, {pipeline_mode = #tpu.pipeline_mode<synchronous>, transform_indices = @transform_4, window_bounds = array<i64: 1, 128>}, {transform_indices = @transform_5, window_bounds = array<i64: 16, 5>}]} {
    %c0 = arith.constant 0 : index
    %c0_0 = arith.constant 0 : index
    %0 = vector.load %arg1[%c0, %c0_0] : memref<16x32xf32, #tpu.memory_space<vmem>>, vector<16x32xf32>
    %1 = arith.truncf %0 : vector<16x32xf32> to vector<16x32xbf16>
    %c0_1 = arith.constant 0 : index
    %c0_2 = arith.constant 0 : index
    %2 = vector.load %arg2[%c0_1, %c0_2] : memref<32x128xbf16, #tpu.memory_space<vmem>>, vector<32x128xbf16>
    %cst = arith.constant dense<0.000000e+00> : vector<16x128xf32>
    %3 = tpu.matmul %1, %2, %cst {dimension_numbers = #tpu.dot_dimension_numbers<[1], [0], [0], [1], [0, 0, 1, 1], [], []>} : vector<16x32xbf16>, vector<32x128xbf16>, vector<16x128xf32> -> vector<16x128xf32>
    %c0_3 = arith.constant 0 : index
    %c0_4 = arith.constant 0 : index
    %4 = vector.load %arg3[%c0_3, %c0_4] : memref<1x128xf32, #tpu.memory_space<vmem>>, vector<1x128xf32>
    %5 = vector.broadcast %4 : vector<1x128xf32> to vector<16x128xf32>
    %6 = arith.addf %3, %5 : vector<16x128xf32>
    %cst_5 = arith.constant 0.000000e+00 : f32
    %7 = vector.broadcast %cst_5 : f32 to vector<16x128xf32>
    %8 = arith.maximumf %6, %7 : vector<16x128xf32>
    %9 = arith.truncf %8 : vector<16x128xf32> to vector<16x128xbf16>
    %c0_6 = arith.constant 0 : index
    %c0_7 = arith.constant 0 : index
    %10 = vector.load %arg4[%c0_6, %c0_7] : memref<128x128xbf16, #tpu.memory_space<vmem>>, vector<128x128xbf16>
    %cst_8 = arith.constant dense<0.000000e+00> : vector<16x128xf32>
    %11 = tpu.matmul %9, %10, %cst_8 {dimension_numbers = #tpu.dot_dimension_numbers<[1], [0], [0], [1], [0, 0, 1, 1], [], []>} : vector<16x128xbf16>, vector<128x128xbf16>, vector<16x128xf32> -> vector<16x128xf32>
    %c0_9 = arith.constant 0 : index
    %c0_10 = arith.constant 0 : index
    %12 = vector.load %arg5[%c0_9, %c0_10] : memref<1x128xf32, #tpu.memory_space<vmem>>, vector<1x128xf32>
    %13 = vector.broadcast %12 : vector<1x128xf32> to vector<16x128xf32>
    %14 = arith.addf %11, %13 : vector<16x128xf32>
    %15 = vector.extract_strided_slice %14 {offsets = [0, 0], sizes = [16, 5], strides = [1, 1]} : vector<16x128xf32> to vector<16x5xf32>
    %c0_11 = arith.constant 0 : index
    %c0_12 = arith.constant 0 : index
    %16 = vector.load %arg6[%c0_11, %c0_12] : memref<16x5xf32, #tpu.memory_space<vmem>>, vector<16x5xf32>
    tpu.vector_store %arg6[%c0_11, %c0_12], %15 {strides = array<i32>} : memref<16x5xf32, #tpu.memory_space<vmem>>, vector<16x5xf32>,
    return
  }
  func.func @transform_0(%arg0: i32) -> (i32, i32) {
    %c0_i32 = arith.constant 0 : i32
    %c0_i32_0 = arith.constant 0 : i32
    return %arg0, %c0_i32 : i32, i32
  }
  func.func @transform_1(%arg0: i32) -> (i32, i32) {
    %c0_i32 = arith.constant 0 : i32
    %c0_i32_0 = arith.constant 0 : i32
    %c0_i32_1 = arith.constant 0 : i32
    return %c0_i32, %c0_i32_0 : i32, i32
  }
  func.func @transform_2(%arg0: i32) -> (i32, i32) {
    %c0_i32 = arith.constant 0 : i32
    %c0_i32_0 = arith.constant 0 : i32
    %c0_i32_1 = arith.constant 0 : i32
    return %c0_i32, %c0_i32_0 : i32, i32
  }
  func.func @transform_3(%arg0: i32) -> (i32, i32) {
    %c0_i32 = arith.constant 0 : i32
    %c0_i32_0 = arith.constant 0 : i32
    %c0_i32_1 = arith.constant 0 : i32
    return %c0_i32, %c0_i32_0 : i32, i32
  }
  func.func @transform_4(%arg0: i32) -> (i32, i32) {
    %c0_i32 = arith.constant 0 : i32
    %c0_i32_0 = arith.constant 0 : i32
    %c0_i32_1 = arith.constant 0 : i32
    return %c0_i32, %c0_i32_0 : i32, i32
  }
  func.func @transform_5(%arg0: i32) -> (i32, i32) {
    %c0_i32 = arith.constant 0 : i32
    %c0_i32_0 = arith.constant 0 : i32
    return %arg0, %c0_i32 : i32, i32
  }
}

</mosaic_0001>

<llo_original>
// kernel: tpu_custom_call.1
$region0: #{tpu_custom_call.1}
  #allocation0 [shape = 'u32[]', space=smem, size = 0x4, offset = 0x4, fixed_abs, tag = 'smem constant byte address 0x4 - core index']
  #allocation1 [shape = 'u32[72,128]{1,0:T(1,128)}', space=vmem, size = 0x9000, scoped, tag = 'internal scratch']
  %s0 = inlined_call_operand.hbm [shape: f32[16,32], index: 0, kind: input, shape index: {}]
  %s1 = inlined_call_operand.hbm [shape: bf16[32,128], index: 1, kind: input, shape index: {}]
  %s2 = inlined_call_operand.vmem [shape: f32[1,128], index: 2, kind: input, shape index: {}]
  %s3 = inlined_call_operand.hbm [shape: bf16[128,128], index: 3, kind: input, shape index: {}]
  %s4 = inlined_call_operand.vmem [shape: f32[1,128], index: 4, kind: input, shape index: {}]
  %s5 = inlined_call_operand.vmem [shape: f32[16,5], index: 5, kind: output, shape index: {}]
  %s6 = sld [smem:[#allocation0]]
  $region42: #{tpu_custom_call.1} parent=0
    _
  %s8 = ssub.s32 1, %s6
  %s9 = scalar_select 0, %s8, %s6
  $region1: #{tpu_custom_call.1} parent=0
    #allocation2 [shape = 'u8[8192]{0}', space=vmem, size = 0x2000, scoped, tag = 'input window, operand 0, single buffered']
    #allocation3 [shape = 's32[1]{0}', space=sflag, size = 0x4, scoped, tag = 'scoped memory for tpu_custom_call.1']
    #allocation4 [shape = 'u8[8192]{0}', space=vmem, size = 0x2000, scoped, tag = 'input window, operand 1, single buffered']
    #allocation5 [shape = 's32[1]{0}', space=sflag, size = 0x4, scoped, tag = 'scoped memory for tpu_custom_call.1']
    #allocation6 [shape = 'u8[32768]{0}', space=vmem, size = 0x8000, scoped, tag = 'input window, operand 3, single buffered']
    %10 = vsyncpa [#allocation3], 0
    %11 = vsyncpa [#allocation5], 0
    // Predicated region
    $region2: #{tpu_custom_call.1} parent=1 // pred_check
      _
    $region3: #{tpu_custom_call.1} parent=1 // pred_check_branch
      %13 = sbr.rel (0) target = $region5
    $region4: #{tpu_custom_call.1} parent=1 // pred_region
      %15 = vsyncadd [#allocation3], 0
      %s16 = sshll.u32 %s0, 4
      %s17 = int_to_ptr.hbm [resolvable:$true] %s16
      %s18 = sshll.u32 [#allocation2], 4
      %s19 = int_to_ptr.vmem [resolvable:$true] %s18
      %24 = dma.hbm_to_vmem [thread:$0]  %s17, 256, %s19, [#allocation3], 128, 128, 8
    $region5: #{tpu_custom_call.1} parent=1 // pred_fallthru
      _
    // Predicated region
    $region6: #{tpu_custom_call.1} parent=1 // pred_check
      _
    $region7: #{tpu_custom_call.1} parent=1 // pred_check_branch
      %26 = sbr.rel (0) target = $region9
    $region8: #{tpu_custom_call.1} parent=1 // pred_region
      %28 = vsyncadd [#allocation5], 0
      %s29 = sshll.u32 %s1, 4
      %s30 = int_to_ptr.hbm [resolvable:$true] %s29
      %s31 = sshll.u32 [#allocation4], 4
      %s32 = int_to_ptr.vmem [resolvable:$true] %s31
      %37 = dma.hbm_to_vmem [thread:$0]  %s30, 256, %s32, [#allocation5], 64, 64, 4
    $region9: #{tpu_custom_call.1} parent=1 // pred_fallthru
      _
    // Predicated region
    $region10: #{tpu_custom_call.1} parent=1 // pred_check
      _
    $region11: #{tpu_custom_call.1} parent=1 // pred_check_branch
      %39 = sbr.rel (0) target = $region13
    $region12: #{tpu_custom_call.1} parent=1 // pred_region
      _
    $region13: #{tpu_custom_call.1} parent=1 // pred_fallthru
      _
    // Predicated region
    $region14: #{tpu_custom_call.1} parent=1 // pred_check
      _
    $region15: #{tpu_custom_call.1} parent=1 // pred_check_branch
      %41 = sbr.rel (0) target = $region17
    $region16: #{tpu_custom_call.1} parent=1 // pred_region
      %43 = vsyncadd [#allocation5], 0
      %s44 = sshll.u32 %s3, 4
      %s45 = int_to_ptr.hbm [resolvable:$true] %s44
      %s46 = sshll.u32 [#allocation6], 4
      %s47 = int_to_ptr.vmem [resolvable:$true] %s46
      %52 = dma.hbm_to_vmem [thread:$0]  %s45, 1024, %s47, [#allocation5], 64, 64, 4
    $region17: #{tpu_custom_call.1} parent=1 // pred_fallthru
      _
    // Predicated region
    $region18: #{tpu_custom_call.1} parent=1 // pred_check
      _
    $region19: #{tpu_custom_call.1} parent=1 // pred_check_branch
      %54 = sbr.rel (0) target = $region21
    $region20: #{tpu_custom_call.1} parent=1 // pred_region
      _
    $region21: #{tpu_custom_call.1} parent=1 // pred_fallthru
      _
    // Predicated region
    $region22: #{tpu_custom_call.1} parent=1 // pred_check
      _
    $region23: #{tpu_custom_call.1} parent=1 // pred_check_branch
      %56 = sbr.rel (0) target = $region25
    $region24: #{tpu_custom_call.1} parent=1 // pred_region
      %58 = dma.done [#allocation3], 256
    $region25: #{tpu_custom_call.1} parent=1 // pred_fallthru
      _
    // Predicated region
    $region26: #{tpu_custom_call.1} parent=1 // pred_check
      _
    $region27: #{tpu_custom_call.1} parent=1 // pred_check_branch
      %60 = sbr.rel (0) target = $region29
    $region28: #{tpu_custom_call.1} parent=1 // pred_region
      %62 = dma.done [#allocation5], 256
    $region29: #{tpu_custom_call.1} parent=1 // pred_fallthru
      _
    // Predicated region
    $region30: #{tpu_custom_call.1} parent=1 // pred_check
      _
    $region31: #{tpu_custom_call.1} parent=1 // pred_check_branch
      %64 = sbr.rel (0) target = $region33
    $region32: #{tpu_custom_call.1} parent=1 // pred_region
      %66 = dma.done [#allocation5], 1024
    $region33: #{tpu_custom_call.1} parent=1 // pred_fallthru
      _
    %v68 = vld [vmem:[#allocation2] sm:$0xff]
    %v69 = vld [vmem:[#allocation2 + $0x8] sm:$0xff]
    %v70 = vpack.c.bf16 %v69, %v68
    %v71 = vld [vmem:[#allocation4] sm:$0xf]
    %v72 = vld [vmem:[#allocation4 + $0x4] sm:$0xf]
    %v73 = vld [vmem:[#allocation4 + $0x8] sm:$0xf]
    %v74 = vld [vmem:[#allocation4 + $0xc] sm:$0xf]
    %v75 = vld [vmem:[%s2] sm:$0x1]
    %v77 = vperm.slane %v75, 0
    %v83 = vunpack.c.l.b16 %v71
    %v84 = vunpack.c.l.b16 %v72
    %v85 = vunpack.c.l.b16 %v73
    %v86 = vunpack.c.l.b16 %v74
    %v87 = vpack.c.b16 %v84, %v83
    %v88 = vpack.c.b16 %v86, %v85
    %vm91 = vcmask 261120
    %v93 = vsel %vm91, %v70, 0
    %95 = vmatpush.bf16.msra.mxu0 0
    %96 = vmatpush.bf16.msra.mxu0 0
    %97 = vmatpush.bf16.msra.mxu0 0
    %98 = vmatpush.bf16.msra.mxu0 0
    %99 = vmatpush.bf16.msra.mxu0 0
    %100 = vmatpush.bf16.msra.mxu0 0
    %101 = vmatpush.bf16.msra.mxu0 %v88
    %102 = vmatpush.bf16.msra.mxu0 %v87
    %103 = vmatmul.bf16.gmra.mxu0 %v93
    %v104 = vpop.f32.mrf.mxu0
    %v105 = vadd.f32 %v77, %v104
    %v106 = vpop.f32.mrf.mxu0
    %v107 = vadd.f32 %v77, %v106
    %108 = vdwg.mxu0
    %v109 = vmax.f32 %v105, 0.0
    %v110 = vmax.f32 %v107, 0.0
    %v111 = vpack.c.bf16 %v110, %v109
    %v112 = vld [vmem:[#allocation6] sm:$0xf]
    %v113 = vld [vmem:[#allocation6 + $0x4] sm:$0xf]
    %v114 = vld [vmem:[#allocation6 + $0x8] sm:$0xf]
    %v115 = vld [vmem:[#allocation6 + $0xc] sm:$0xf]
    %v116 = vld [vmem:[#allocation6 + $0x10] sm:$0xf]
    %v117 = vld [vmem:[#allocation6 + $0x14] sm:$0xf]
    %v118 = vld [vmem:[#allocation6 + $0x18] sm:$0xf]
    %v119 = vld [vmem:[#allocation6 + $0x1c] sm:$0xf]
    %v120 = vld [vmem:[#allocation6 + $0x20] sm:$0xf]
    %v121 = vld [vmem:[#allocation6 + $0x24] sm:$0xf]
    %v122 = vld [vmem:[#allocation6 + $0x28] sm:$0xf]
    %v123 = vld [vmem:[#allocation6 + $0x2c] sm:$0xf]
    %v124 = vld [vmem:[#allocation6 + $0x30] sm:$0xf]
    %v125 = vld [vmem:[#allocation6 + $0x34] sm:$0xf]
    %v126 = vld [vmem:[#allocation6 + $0x38] sm:$0xf]
    %v127 = vld [vmem:[#allocation6 + $0x3c] sm:$0xf]
    %v128 = vld [vmem:[%s4] sm:$0x1]
    %v130 = vperm.slane %v128, 0
    %v148 = vunpack.c.l.b16 %v112
    %v149 = vunpack.c.l.b16 %v113
    %v150 = vunpack.c.l.b16 %v114
    %v151 = vunpack.c.l.b16 %v115
    %v152 = vunpack.c.l.b16 %v116
    %v153 = vunpack.c.l.b16 %v117
    %v154 = vunpack.c.l.b16 %v118
    %v155 = vunpack.c.l.b16 %v119
    %v156 = vunpack.c.l.b16 %v120
    %v157 = vunpack.c.l.b16 %v121
    %v158 = vunpack.c.l.b16 %v122
    %v159 = vunpack.c.l.b16 %v123
    %v160 = vunpack.c.l.b16 %v124
    %v161 = vunpack.c.l.b16 %v125
    %v162 = vunpack.c.l.b16 %v126
    %v163 = vunpack.c.l.b16 %v127
    %v164 = vpack.c.b16 %v149, %v148
    %v165 = vpack.c.b16 %v151, %v150
    %v166 = vpack.c.b16 %v153, %v152
    %v167 = vpack.c.b16 %v155, %v154
    %v168 = vpack.c.b16 %v157, %v156
    %v169 = vpack.c.b16 %v159, %v158
    %v170 = vpack.c.b16 %v161, %v160
    %v171 = vpack.c.b16 %v163, %v162
    %180 = vmatpush.bf16.msra.mxu0 %v171
    %181 = vmatpush.bf16.msra.mxu0 %v170
    %182 = vmatpush.bf16.msra.mxu0 %v169
    %183 = vmatpush.bf16.msra.mxu0 %v168
    %184 = vmatpush.bf16.msra.mxu0 %v167
    %185 = vmatpush.bf16.msra.mxu0 %v166
    %186 = vmatpush.bf16.msra.mxu0 %v165
    %187 = vmatpush.bf16.msra.mxu0 %v164
    %188 = vmatmul.bf16.gmra.mxu0 %v111
    %v189 = vpop.f32.mrf.mxu0
    %v190 = vadd.f32 %v130, %v189
    %v191 = vpop.f32.mrf.mxu0
    %v192 = vadd.f32 %v130, %v191
    %193 = vdwg.mxu0
    %vm194 = vcmask 39936
    %195 = vst.msk [vmem:[%s5] sm:$0xff] %vm194, %v190
    %196 = vst.msk [vmem:[%s5 + $0x8] sm:$0xff] %vm194, %v192
    // Predicated region
    $region34: #{tpu_custom_call.1} parent=1 // pred_check
      _
    $region35: #{tpu_custom_call.1} parent=1 // pred_check_branch
      %198 = sbr.rel (0) target = $region37
    $region36: #{tpu_custom_call.1} parent=1 // pred_region
      _
    $region37: #{tpu_custom_call.1} parent=1 // pred_fallthru
      _
    // Predicated region
    $region38: #{tpu_custom_call.1} parent=1 // pred_check
      _
    $region39: #{tpu_custom_call.1} parent=1 // pred_check_branch
      %200 = sbr.rel (0) target = $region41
    $region40: #{tpu_custom_call.1} parent=1 // pred_region
      _
    $region41: #{tpu_custom_call.1} parent=1 // pred_fallthru
      _
    %201 = vsyncpa [#allocation3], 1
    %202 = vsyncpa [#allocation5], 1

// kernel: tpu_custom_call.1
$region0: #{tpu_custom_call.1}
  #allocation0 [shape = 'u32[]', space=smem, size = 0x4, offset = 0x4, fixed_abs, tag = 'smem constant byte address 0x4 - core index']
  #allocation1 [shape = 'u32[72,128]{1,0:T(1,128)}', space=vmem, size = 0x9000, scoped, tag = 'internal scratch']
  %s0 = inlined_call_operand.hbm [shape: f32[16,32], index: 0, kind: input, shape index: {}]
  %s1 = inlined_call_operand.hbm [shape: bf16[32,128], index: 1, kind: input, shape index: {}]
  %s2 = inlined_call_operand.vmem [shape: f32[1,128], index: 2, kind: input, shape index: {}]
  %s3 = inlined_call_operand.hbm [shape: bf16[128,128], index: 3, kind: input, shape index: {}]
  %s4 = inlined_call_operand.vmem [shape: f32[1,128], index: 4, kind: input, shape index: {}]
  %s5 = inlined_call_operand.vmem [shape: f32[16,5], index: 5, kind: output, shape index: {}]
  %s6 = sld [smem:[#allocation0]]
  $region42: #{tpu_custom_call.1} parent=0
    _
  %s8 = ssub.s32 1, %s6
  %s9 = scalar_select 0, %s8, %s6
  $region1: #{tpu_custom_call.1} parent=0
    #allocation2 [shape = 'u8[8192]{0}', space=vmem, size = 0x2000, scoped, tag = 'input window, operand 0, single buffered']
    #allocation3 [shape = 's32[1]{0}', space=sflag, size = 0x4, scoped, tag = 'scoped memory for tpu_custom_call.1']
    #allocation4 [shape = 'u8[8192]{0}', space=vmem, size = 0x2000, scoped, tag = 'input window, operand 1, single buffered']
    #allocation5 [shape = 's32[1]{0}', space=sflag, size = 0x4, scoped, tag = 'scoped memory for tpu_custom_call.1']
    #allocation6 [shape = 'u8[32768]{0}', space=vmem, size = 0x8000, scoped, tag = 'input window, operand 3, single buffered']
    %10 = vsyncpa [#allocation3], 0
    %11 = vsyncpa [#allocation5], 0
    // Predicated region
    $region2: #{tpu_custom_call.1} parent=1 // pred_check
      _
    $region3: #{tpu_custom_call.1} parent=1 // pred_check_branch
      %13 = sbr.rel (0) target = $region5
    $region4: #{tpu_custom_call.1} parent=1 // pred_region
      %15 = vsyncadd [#allocation3], 0
      %s16 = sshll.u32 %s0, 4
      %s17 = int_to_ptr.hbm [resolvable:$true] %s16
      %s18 = sshll.u32 [#allocation2], 4
      %s19 = int_to_ptr.vmem [resolvable:$true] %s18
      %24 = dma.hbm_to_vmem [thread:$0]  %s17, 256, %s19, [#allocation3], 128, 128, 8
    $region5: #{tpu_custom_call.1} parent=1 // pred_fallthru
      _
    // Predicated region
    $region6: #{tpu_custom_call.1} parent=1 // pred_check
      _
    $region7: #{tpu_custom_call.1} parent=1 // pred_check_branch
      %26 = sbr.rel (0) target = $region9
    $region8: #{tpu_custom_call.1} parent=1 // pred_region
      %28 = vsyncadd [#allocation5], 0
      %s29 = sshll.u32 %s1, 4
      %s30 = int_to_ptr.hbm [resolvable:$true] %s29
      %s31 = sshll.u32 [#allocation4], 4
      %s32 = int_to_ptr.vmem [resolvable:$true] %s31
      %37 = dma.hbm_to_vmem [thread:$0]  %s30, 256, %s32, [#allocation5], 64, 64, 4
    $region9: #{tpu_custom_call.1} parent=1 // pred_fallthru
      _
    // Predicated region
    $region10: #{tpu_custom_call.1} parent=1 // pred_check
      _
    $region11: #{tpu_custom_call.1} parent=1 // pred_check_branch
      %39 = sbr.rel (0) target = $region13
    $region12: #{tpu_custom_call.1} parent=1 // pred_region
      _
    $region13: #{tpu_custom_call.1} parent=1 // pred_fallthru
      _
    // Predicated region
    $region14: #{tpu_custom_call.1} parent=1 // pred_check
      _
    $region15: #{tpu_custom_call.1} parent=1 // pred_check_branch
      %41 = sbr.rel (0) target = $region17
    $region16: #{tpu_custom_call.1} parent=1 // pred_region
      %43 = vsyncadd [#allocation5], 0
      %s44 = sshll.u32 %s3, 4
      %s45 = int_to_ptr.hbm [resolvable:$true] %s44
      %s46 = sshll.u32 [#allocation6], 4
      %s47 = int_to_ptr.vmem [resolvable:$true] %s46
      %52 = dma.hbm_to_vmem [thread:$0]  %s45, 1024, %s47, [#allocation5], 64, 64, 4
    $region17: #{tpu_custom_call.1} parent=1 // pred_fallthru
      _
    // Predicated region
    $region18: #{tpu_custom_call.1} parent=1 // pred_check
      _
    $region19: #{tpu_custom_call.1} parent=1 // pred_check_branch
      %54 = sbr.rel (0) target = $region21
    $region20: #{tpu_custom_call.1} parent=1 // pred_region
      _
    $region21: #{tpu_custom_call.1} parent=1 // pred_fallthru
      _
    // Predicated region
    $region22: #{tpu_custom_call.1} parent=1 // pred_check
      _
    $region23: #{tpu_custom_call.1} parent=1 // pred_check_branch
      %56 = sbr.rel (0) target = $region25
    $region24: #{tpu_custom_call.1} parent=1 // pred_region
      %58 = dma.done [#allocation3], 256
    $region25: #{tpu_custom_call.1} parent=1 // pred_fallthru
      _
    // Predicated region
    $region26: #{tpu_custom_call.1} parent=1 // pred_check
      _
    $region27: #{tpu_custom_call.1} parent=1 // pred_check_branch
      %60 = sbr.rel (0) target = $region29
    $region28: #{tpu_custom_call.1} parent=1 // pred_region
      %62 = dma.done [#allocation5], 256
    $region29: #{tpu_custom_call.1} parent=1 // pred_fallthru
      _
    // Predicated region
    $region30: #{tpu_custom_call.1} parent=1 // pred_check
      _
    $region31: #{tpu_custom_call.1} parent=1 // pred_check_branch
      %64 = sbr.rel (0) target = $region33
    $region32: #{tpu_custom_call.1} parent=1 // pred_region
      %66 = dma.done [#allocation5], 1024
    $region33: #{tpu_custom_call.1} parent=1 // pred_fallthru
      _
    %v68 = vld [vmem:[#allocation2] sm:$0xff]
    %v69 = vld [vmem:[#allocation2 + $0x8] sm:$0xff]
    %v70 = vpack.c.bf16 %v69, %v68
    %v71 = vld [vmem:[#allocation4] sm:$0xf]
    %v72 = vld [vmem:[#allocation4 + $0x4] sm:$0xf]
    %v73 = vld [vmem:[#allocation4 + $0x8] sm:$0xf]
    %v74 = vld [vmem:[#allocation4 + $0xc] sm:$0xf]
    %v75 = vld [vmem:[%s2] sm:$0x1]
    %v77 = vperm.slane %v75, 0
    %v83 = vunpack.c.l.b16 %v71
    %v84 = vunpack.c.l.b16 %v72
    %v85 = vunpack.c.l.b16 %v73
    %v86 = vunpack.c.l.b16 %v74
    %v87 = vpack.c.b16 %v84, %v83
    %v88 = vpack.c.b16 %v86, %v85
    %vm91 = vcmask 261120
    %v93 = vsel %vm91, %v70, 0
    %95 = vmatpush.bf16.msra.mxu0 0
    %96 = vmatpush.bf16.msra.mxu0 0
    %97 = vmatpush.bf16.msra.mxu0 0
    %98 = vmatpush.bf16.msra.mxu0 0
    %99 = vmatpush.bf16.msra.mxu0 0
    %100 = vmatpush.bf16.msra.mxu0 0
    %101 = vmatpush.bf16.msra.mxu0 %v88
    %102 = vmatpush.bf16.msra.mxu0 %v87
    %103 = vmatmul.bf16.gmra.mxu0 %v93
    %v104 = vpop.f32.mrf.mxu0
    %v105 = vadd.f32 %v77, %v104
    %v106 = vpop.f32.mrf.mxu0
    %v107 = vadd.f32 %v77, %v106
    %108 = vdwg.mxu0
    %v109 = vmax.f32 %v105, 0.0
    %v110 = vmax.f32 %v107, 0.0
    %v111 = vpack.c.bf16 %v110, %v109
    %v112 = vld [vmem:[#allocation6] sm:$0xf]
    %v113 = vld [vmem:[#allocation6 + $0x4] sm:$0xf]
    %v114 = vld [vmem:[#allocation6 + $0x8] sm:$0xf]
    %v115 = vld [vmem:[#allocation6 + $0xc] sm:$0xf]
    %v116 = vld [vmem:[#allocation6 + $0x10] sm:$0xf]
    %v117 = vld [vmem:[#allocation6 + $0x14] sm:$0xf]
    %v118 = vld [vmem:[#allocation6 + $0x18] sm:$0xf]
    %v119 = vld [vmem:[#allocation6 + $0x1c] sm:$0xf]
    %v120 = vld [vmem:[#allocation6 + $0x20] sm:$0xf]
    %v121 = vld [vmem:[#allocation6 + $0x24] sm:$0xf]
    %v122 = vld [vmem:[#allocation6 + $0x28] sm:$0xf]
    %v123 = vld [vmem:[#allocation6 + $0x2c] sm:$0xf]
    %v124 = vld [vmem:[#allocation6 + $0x30] sm:$0xf]
    %v125 = vld [vmem:[#allocation6 + $0x34] sm:$0xf]
    %v126 = vld [vmem:[#allocation6 + $0x38] sm:$0xf]
    %v127 = vld [vmem:[#allocation6 + $0x3c] sm:$0xf]
    %v128 = vld [vmem:[%s4] sm:$0x1]
    %v130 = vperm.slane %v128, 0
    %v148 = vunpack.c.l.b16 %v112
    %v149 = vunpack.c.l.b16 %v113
    %v150 = vunpack.c.l.b16 %v114
    %v151 = vunpack.c.l.b16 %v115
    %v152 = vunpack.c.l.b16 %v116
    %v153 = vunpack.c.l.b16 %v117
    %v154 = vunpack.c.l.b16 %v118
    %v155 = vunpack.c.l.b16 %v119
    %v156 = vunpack.c.l.b16 %v120
    %v157 = vunpack.c.l.b16 %v121
    %v158 = vunpack.c.l.b16 %v122
    %v159 = vunpack.c.l.b16 %v123
    %v160 = vunpack.c.l.b16 %v124
    %v161 = vunpack.c.l.b16 %v125
    %v162 = vunpack.c.l.b16 %v126
    %v163 = vunpack.c.l.b16 %v127
    %v164 = vpack.c.b16 %v149, %v148
    %v165 = vpack.c.b16 %v151, %v150
    %v166 = vpack.c.b16 %v153, %v152
    %v167 = vpack.c.b16 %v155, %v154
    %v168 = vpack.c.b16 %v157, %v156
    %v169 = vpack.c.b16 %v159, %v158
    %v170 = vpack.c.b16 %v161, %v160
    %v171 = vpack.c.b16 %v163, %v162
    %180 = vmatpush.bf16.msra.mxu0 %v171
    %181 = vmatpush.bf16.msra.mxu0 %v170
    %182 = vmatpush.bf16.msra.mxu0 %v169
    %183 = vmatpush.bf16.msra.mxu0 %v168
    %184 = vmatpush.bf16.msra.mxu0 %v167
    %185 = vmatpush.bf16.msra.mxu0 %v166
    %186 = vmatpush.bf16.msra.mxu0 %v165
    %187 = vmatpush.bf16.msra.mxu0 %v164
    %188 = vmatmul.bf16.gmra.mxu0 %v111
    %v189 = vpop.f32.mrf.mxu0
    %v190 = vadd.f32 %v130, %v189
    %v191 = vpop.f32.mrf.mxu0
    %v192 = vadd.f32 %v130, %v191
    %193 = vdwg.mxu0
    %vm194 = vcmask 39936
    %195 = vst.msk [vmem:[%s5] sm:$0xff] %vm194, %v190
    %196 = vst.msk [vmem:[%s5 + $0x8] sm:$0xff] %vm194, %v192
    // Predicated region
    $region34: #{tpu_custom_call.1} parent=1 // pred_check
      _
    $region35: #{tpu_custom_call.1} parent=1 // pred_check_branch
      %198 = sbr.rel (0) target = $region37
    $region36: #{tpu_custom_call.1} parent=1 // pred_region
      _
    $region37: #{tpu_custom_call.1} parent=1 // pred_fallthru
      _
    // Predicated region
    $region38: #{tpu_custom_call.1} parent=1 // pred_check
      _
    $region39: #{tpu_custom_call.1} parent=1 // pred_check_branch
      %200 = sbr.rel (0) target = $region41
    $region40: #{tpu_custom_call.1} parent=1 // pred_region
      _
    $region41: #{tpu_custom_call.1} parent=1 // pred_fallthru
      _
    %201 = vsyncpa [#allocation3], 1
    %202 = vsyncpa [#allocation5], 1

</llo_original>
